<compile_context>
chip_gen: v7x
topology: tpu7x:2x2x1
jax: 0.10.0
libtpu: 0.0.40
codegen_flags: <defaults>
</compile_context>

<pallas_src>
import jax
import jax.numpy as jnp
from jax.experimental import pallas as pl
from jax.experimental.pallas import tpu as pltpu


def linear_kernel(x_ref, w_ref, b_ref, o_ref):
    # x_ref: (Bp, K)   w_ref: (K, Np)   b_ref: (1, Np)   o_ref: (Bp, Np)
    x = x_ref[...].astype(jnp.float32)
    w = w_ref[...].astype(jnp.float32)

    # Start from the broadcast bias (hoisted once), then accumulate K
    # broadcast FMAs on the VPU.  K is static (4) -> fully unrolled.
    acc = jnp.broadcast_to(b_ref[...].astype(jnp.float32), o_ref.shape)
    K = x.shape[1]
    for k in range(K):
        acc = acc + x[:, k:k + 1] * w[k:k + 1, :]

    o_ref[...] = acc.astype(o_ref.dtype)


def _round_up(v, m):
    return ((v + m - 1) // m) * m


def linear_forward(x, weight, bias):
    """y = x @ weight.T + bias, PyTorch nn.Linear semantics.

    x: (B, K) f32, weight: (N, K) f32, bias: (N,) f32 -> (B, N) f32
    """
    B, K = x.shape
    N, K2 = weight.shape
    assert K == K2

    Bp = _round_up(max(B, 8), 8)      # sublane-aligned rows
    Np = _round_up(max(N, 128), 128)  # lane-dense output columns

    # Wrapper-side layout prep (fused by XLA): pre-transpose weight to (K, N)
    # and zero-pad everything to a full (8, 128) output tile.
    x_p = jnp.zeros((Bp, K), x.dtype).at[:B, :].set(x)
    w_kn = jnp.zeros((K, Np), weight.dtype).at[:, :N].set(weight.T)
    b_p = jnp.zeros((1, Np), bias.dtype).at[0, :N].set(bias)

    out_p = pl.pallas_call(
        linear_kernel,
        out_shape=jax.ShapeDtypeStruct((Bp, Np), x.dtype),
        in_specs=[
            pl.BlockSpec(memory_space=pltpu.MemorySpace.VMEM),
            pl.BlockSpec(memory_space=pltpu.MemorySpace.VMEM),
            pl.BlockSpec(memory_space=pltpu.MemorySpace.VMEM),
        ],
        out_specs=pl.BlockSpec(memory_space=pltpu.MemorySpace.VMEM),
    )(x_p, w_kn, b_p)

    return out_p[:B, :N]


linear_forward_jit = jax.jit(linear_forward)


if __name__ == "__main__":
    key = jax.random.PRNGKey(0)
    kx, kw, kb = jax.random.split(key, 3)

    B, K, N = 2, 4, 5

    # Deterministic synthetic input and parameters (nn.Linear(4, 5) shapes).
    x = jax.random.normal(kx, (B, K), dtype=jnp.float32)
    # PyTorch default init: U(-1/sqrt(in_features), 1/sqrt(in_features))
    bound = 1.0 / jnp.sqrt(jnp.float32(K))
    weight = jax.random.uniform(kw, (N, K), jnp.float32, -bound, bound)
    bias = jax.random.uniform(kb, (N,), jnp.float32, -bound, bound)

    out = linear_forward_jit(x, weight, bias)
    out = jax.block_until_ready(out)

    # Pure-JAX reference check.
    ref = x @ weight.T + bias
    assert out.shape == (B, N)
    assert jnp.allclose(out, ref, atol=1e-5, rtol=1e-5)

    print("KERNEL_OK")
</pallas_src>

<mosaic_0001>
module attributes {stable_mosaic.version = 11 : i64} {
  func.func @linear_kernel(%arg0: memref<8x4xf32, #tpu.memory_space<vmem>>, %arg1: memref<4x128xf32, #tpu.memory_space<vmem>>, %arg2: memref<1x128xf32, #tpu.memory_space<vmem>>, %arg3: memref<8x128xf32, #tpu.memory_space<vmem>>) attributes {dimension_semantics = [], scalar_prefetch = 0 : i64, scratch_operands = 0 : i64, tpu.core_type = #tpu.core_type<tc>} {
    %c0 = arith.constant 0 : index
    %c0_0 = arith.constant 0 : index
    %0 = vector.load %arg0[%c0, %c0_0] : memref<8x4xf32, #tpu.memory_space<vmem>>, vector<8x4xf32>
    %c0_1 = arith.constant 0 : index
    %c0_2 = arith.constant 0 : index
    %1 = vector.load %arg1[%c0_1, %c0_2] : memref<4x128xf32, #tpu.memory_space<vmem>>, vector<4x128xf32>
    %c0_3 = arith.constant 0 : index
    %c0_4 = arith.constant 0 : index
    %2 = vector.load %arg2[%c0_3, %c0_4] : memref<1x128xf32, #tpu.memory_space<vmem>>, vector<1x128xf32>
    %3 = vector.shape_cast %2 : vector<1x128xf32> to vector<1x128xf32>
    %4 = vector.broadcast %3 : vector<1x128xf32> to vector<8x128xf32>
    %5 = vector.extract_strided_slice %0 {offsets = [0, 0], sizes = [8, 1], strides = [1, 1]} : vector<8x4xf32> to vector<8x1xf32>
    %6 = vector.extract_strided_slice %1 {offsets = [0, 0], sizes = [1, 128], strides = [1, 1]} : vector<4x128xf32> to vector<1x128xf32>
    %7 = vector.broadcast %5 : vector<8x1xf32> to vector<8x128xf32>
    %8 = vector.broadcast %6 : vector<1x128xf32> to vector<8x128xf32>
    %9 = arith.mulf %7, %8 : vector<8x128xf32>
    %10 = arith.addf %4, %9 : vector<8x128xf32>
    %11 = vector.extract_strided_slice %0 {offsets = [0, 1], sizes = [8, 1], strides = [1, 1]} : vector<8x4xf32> to vector<8x1xf32>
    %12 = vector.extract_strided_slice %1 {offsets = [1, 0], sizes = [1, 128], strides = [1, 1]} : vector<4x128xf32> to vector<1x128xf32>
    %13 = vector.broadcast %11 : vector<8x1xf32> to vector<8x128xf32>
    %14 = vector.broadcast %12 : vector<1x128xf32> to vector<8x128xf32>
    %15 = arith.mulf %13, %14 : vector<8x128xf32>
    %16 = arith.addf %10, %15 : vector<8x128xf32>
    %17 = vector.extract_strided_slice %0 {offsets = [0, 2], sizes = [8, 1], strides = [1, 1]} : vector<8x4xf32> to vector<8x1xf32>
    %18 = vector.extract_strided_slice %1 {offsets = [2, 0], sizes = [1, 128], strides = [1, 1]} : vector<4x128xf32> to vector<1x128xf32>
    %19 = vector.broadcast %17 : vector<8x1xf32> to vector<8x128xf32>
    %20 = vector.broadcast %18 : vector<1x128xf32> to vector<8x128xf32>
    %21 = arith.mulf %19, %20 : vector<8x128xf32>
    %22 = arith.addf %16, %21 : vector<8x128xf32>
    %23 = vector.extract_strided_slice %0 {offsets = [0, 3], sizes = [8, 1], strides = [1, 1]} : vector<8x4xf32> to vector<8x1xf32>
    %24 = vector.extract_strided_slice %1 {offsets = [3, 0], sizes = [1, 128], strides = [1, 1]} : vector<4x128xf32> to vector<1x128xf32>
    %25 = vector.broadcast %23 : vector<8x1xf32> to vector<8x128xf32>
    %26 = vector.broadcast %24 : vector<1x128xf32> to vector<8x128xf32>
    %27 = arith.mulf %25, %26 : vector<8x128xf32>
    %28 = arith.addf %22, %27 : vector<8x128xf32>
    %c0_5 = arith.constant 0 : index
    %c0_6 = arith.constant 0 : index
    %29 = vector.load %arg3[%c0_5, %c0_6] : memref<8x128xf32, #tpu.memory_space<vmem>>, vector<8x128xf32>
    tpu.vector_store %arg3[%c0_5, %c0_6], %28 {strides = array<i32>} : memref<8x128xf32, #tpu.memory_space<vmem>>, vector<8x128xf32>,
    return
  }
}

</mosaic_0001>

<llo_original>
// kernel: linear_forward.1
$region0: #{linear_forward.1}
  #allocation0 [shape = 'u32[]', space=smem, size = 0x4, offset = 0x4, fixed_abs, tag = 'smem constant byte address 0x4 - core index']
  #allocation1 [shape = 'u32[144,128]{1,0:T(1,128)}', space=vmem, size = 0x12000, scoped, tag = 'internal scratch']
  %s0 = inlined_call_operand.vmem [shape: f32[8,4], index: 0, kind: input, shape index: {}]
  %s1 = inlined_call_operand.vmem [shape: f32[4,128], index: 1, kind: input, shape index: {}]
  %s2 = inlined_call_operand.vmem [shape: f32[1,128], index: 2, kind: input, shape index: {}]
  %s3 = inlined_call_operand.vmem [shape: f32[8,128], index: 3, kind: output, shape index: {}]
  %s4 = sld [smem:[#allocation0]]
  $region22: #{linear_forward.1} parent=0
    _
  %s6 = ssub.s32 1, %s4
  %s7 = scalar_select 0, %s6, %s4
  // Predicated region
  $region2: #{linear_forward.1} parent=0 // pred_check
    _
  $region3: #{linear_forward.1} parent=0 // pred_check_branch
    %9 = sbr.rel (0) target = $region5
  $region4: #{linear_forward.1} parent=0 // pred_region
    _
  $region5: #{linear_forward.1} parent=0 // pred_fallthru
    _
  // Predicated region
  $region6: #{linear_forward.1} parent=0 // pred_check
    _
  $region7: #{linear_forward.1} parent=0 // pred_check_branch
    %11 = sbr.rel (0) target = $region9
  $region8: #{linear_forward.1} parent=0 // pred_region
    _
  $region9: #{linear_forward.1} parent=0 // pred_fallthru
    _
  // Predicated region
  $region10: #{linear_forward.1} parent=0 // pred_check
    _
  $region11: #{linear_forward.1} parent=0 // pred_check_branch
    %13 = sbr.rel (0) target = $region13
  $region12: #{linear_forward.1} parent=0 // pred_region
    _
  $region13: #{linear_forward.1} parent=0 // pred_fallthru
    _
  %v14 = vld [vmem:[%s0] sm:$0xff]
  %v15 = vld [vmem:[%s1] sm:$0xf]
  %v16 = vld [vmem:[%s2] sm:$0x1]
  %v18 = vlaneseq
  %v19 = vshrl.u32 %v18, 7
  %v20 = vsub.s32 0, %v19
  %v21 = vrot.slane %v16, %v20
  %24 = vset.pattern.permute.xlu0 0
  %25 = vperm.xlu0 %24, %v14
  %v26 = vpop.permute.xlu0 %25
  %v28 = vlaneseq
  %v29 = vshrl.u32 %v28, 7
  %v30 = vsub.s32 0, %v29
  %v31 = vrot.slane %v15, %v30
  %v32 = vmul.f32 %v26, %v31
  %v33 = vadd.f32 %v21, %v32
  %34 = vset.pattern.permute.xlu0 1
  %35 = vperm.xlu0 %34, %v14
  %v36 = vpop.permute.xlu0 %35
  %v38 = vlaneseq
  %v39 = vshrl.u32 %v38, 7
  %v40 = vsub.s32 1, %v39
  %v41 = vrot.slane %v15, %v40
  %v42 = vmul.f32 %v36, %v41
  %v43 = vadd.f32 %v33, %v42
  %44 = vset.pattern.permute.xlu0 2
  %45 = vperm.xlu0 %44, %v14
  %v46 = vpop.permute.xlu0 %45
  %v48 = vlaneseq
  %v49 = vshrl.u32 %v48, 7
  %v50 = vsub.s32 2, %v49
  %v51 = vrot.slane %v15, %v50
  %v52 = vmul.f32 %v46, %v51
  %v53 = vadd.f32 %v43, %v52
  %54 = vset.pattern.permute.xlu0 3
  %55 = vperm.xlu0 %54, %v14
  %v56 = vpop.permute.xlu0 %55
  %v58 = vlaneseq
  %v59 = vshrl.u32 %v58, 7
  %v60 = vsub.s32 3, %v59
  %v61 = vrot.slane %v15, %v60
  %v62 = vmul.f32 %v56, %v61
  %v63 = vadd.f32 %v53, %v62
  %64 = vst [vmem:[%s3] sm:$0xff] %v63
  // Predicated region
  $region14: #{linear_forward.1} parent=0 // pred_check
    _
  $region15: #{linear_forward.1} parent=0 // pred_check_branch
    %66 = sbr.rel (0) target = $region17
  $region16: #{linear_forward.1} parent=0 // pred_region
    _
  $region17: #{linear_forward.1} parent=0 // pred_fallthru
    _
  // Predicated region
  $region18: #{linear_forward.1} parent=0 // pred_check
    _
  $region19: #{linear_forward.1} parent=0 // pred_check_branch
    %68 = sbr.rel (0) target = $region21
  $region20: #{linear_forward.1} parent=0 // pred_region
    _
  $region21: #{linear_forward.1} parent=0 // pred_fallthru
    _

</llo_original>
